<compile_context>
chip_gen: v7x
topology: tpu7x:2x2x1
jax: 0.10.0
libtpu: 0.0.40
codegen_flags: <defaults>
</compile_context>

<pallas_src>
import jax
import jax.numpy as jnp
from jax.experimental import pallas as pl
from jax.experimental.pallas import tpu as pltpu

_MIB = 1024 * 1024
_LANE_CHOICES = (4096, 2048, 1024, 512, 256, 128)
# Block (in elements) for the ragged fallback path; multiple of 8*128.
_ODD_BLOCK_ELEMS = 32 * 1024


def _inverse_clr_kernel(bp_ref, x_ref, o_ref):
    # bp_ref (SMEM, scalar-prefetched) holds beta' = beta / scale.
    bp = bp_ref[0]
    two_bp = 2.0 * bp
    x = x_ref[...].astype(jnp.float32)
    # Sign via one compare+select instead of jnp.sign: at x == 0 the inner
    # branch wins when bp > 0, and when bp == 0 both forms give 0.
    outer = jnp.where(x < 0.0, -two_bp, two_bp) - x
    z = jnp.where(jnp.abs(x) < bp, x, outer)
    o_ref[...] = z.astype(o_ref.dtype)


def _tpu_plan():
    """Generation-aware (target_block_bytes, is_multicore_v7)."""
    kind = ""
    try:
        kind = jax.devices()[0].device_kind.lower()
    except Exception:
        pass
    if "v7" in kind or "7x" in kind:
        # ~3.2 TB/s per TC: 2 MiB steps leave ~20% in per-step overhead, 6 MiB
        # cuts it below 10%.  4 x 6 MiB double-buffered in+out = 24 MiB.
        return 6 * _MIB, True
    if "v6" in kind:
        return 4 * _MIB, False        # 4 x 4 MiB well under the 32 MiB default
    return 2 * _MIB, False            # v5e / unknown: stay small and safe


@jax.jit
def inverse_clr(x, beta, scale):
    """Elementwise InverseCLR.  x: any shape (e.g. NCHW); beta/scale: (1,)."""
    # In-place parameter clamps from the PyTorch forward(), done functionally.
    beta = jnp.maximum(jnp.asarray(beta, jnp.float32), 0.0)
    scale = jnp.maximum(jnp.asarray(scale, jnp.float32), 0.01)
    beta_prime = jnp.reshape(beta / scale, (1,))

    orig_shape = x.shape
    orig_dtype = x.dtype
    n = x.size
    itemsize = jnp.dtype(orig_dtype).itemsize
    target_block_bytes, is_v7 = _tpu_plan()

    # NOTE: if XLA picked a tiled/padded layout for a large conv activation,
    # this flatten may insert a relayout copy; if the HLO shows one, tile over
    # (prod(leading_dims), trailing_dim) of the original shape instead.
    xf = x.reshape(-1)

    lane = None
    for cand in _LANE_CHOICES:
        if n % cand == 0:
            lane = cand
            break

    if lane is not None:
        # Fast path: lane-dense (rows, lane) slab, zero padding / zero copies.
        rows = n // lane
        x2d = xf.reshape(rows, lane)
        bytes_per_row = lane * itemsize
        block_rows = max(32, (target_block_bytes // bytes_per_row) // 32 * 32)
        block_rows = min(block_rows, rows)   # tiny arrays: one full block
        block_shape = (block_rows, lane)
        grid = (pl.cdiv(rows, block_rows),)
        index_map = lambda i, bp: (i, 0)
    else:
        # Ragged path (n not a multiple of 128): view as (1, n), block over the
        # lane dim and let Pallas mask the partial last block — no jnp.pad and
        # no out[:n] slice (each of those is a full extra HBM pass).
        x2d = xf.reshape(1, n)
        block_lane = n if n <= _ODD_BLOCK_ELEMS else _ODD_BLOCK_ELEMS
        block_shape = (1, block_lane)
        grid = (pl.cdiv(n, block_lane),)
        index_map = lambda i, bp: (0, i)

    # Explicit VMEM budget: 2 double-buffered operands (in + out) of one block
    # each, with conservative sublane padding, plus headroom.  Max ~32 MiB
    # (v7x, 6 MiB blocks) — below every generation's physical VMEM.
    padded_rows = max(block_shape[0], 32)
    block_vmem_bytes = padded_rows * block_shape[1] * itemsize
    vmem_limit = int(4 * block_vmem_bytes + 8 * _MIB)

    if is_v7 and grid[0] >= 2:
        dims = (pltpu.CORE_PARALLEL,)     # shard the grid across both TCs
    else:
        dims = ("parallel",)

    out2d = pl.pallas_call(
        _inverse_clr_kernel,
        out_shape=jax.ShapeDtypeStruct(x2d.shape, orig_dtype),
        grid_spec=pltpu.PrefetchScalarGridSpec(
            num_scalar_prefetch=1,                       # beta' -> SMEM once
            grid=grid,
            in_specs=[pl.BlockSpec(block_shape, index_map)],
            out_specs=pl.BlockSpec(block_shape, index_map),
        ),
        compiler_params=pltpu.CompilerParams(
            dimension_semantics=dims,
            vmem_limit_bytes=vmem_limit,
        ),
        cost_estimate=pl.CostEstimate(
            flops=4 * n,
            transcendentals=0,
            bytes_accessed=2 * n * itemsize + 4,
        ),
    )(beta_prime, x2d)

    return out2d.reshape(orig_shape)


def _reference(x, beta, scale):
    """Unfolded reference matching the PyTorch forward exactly (in f32)."""
    beta = jnp.maximum(jnp.asarray(beta, jnp.float32), 0.0)
    scale = jnp.maximum(jnp.asarray(scale, jnp.float32), 0.01)
    xf = x.astype(jnp.float32)
    xs = scale * xf
    z = jnp.where(jnp.abs(xs) < beta, xs, -xs + 2.0 * beta * jnp.sign(xs))
    return (z / scale).astype(x.dtype)


if __name__ == "__main__":
    key = jax.random.PRNGKey(0)
    k1, k2, k3 = jax.random.split(key, 3)

    # Primary NCHW conv-activation case (f32; element count divisible by 128).
    x = jax.random.normal(k1, (2, 4, 16, 16), dtype=jnp.float32) * 2.0
    beta = jnp.ones((1,), jnp.float32)       # nn.Parameter(torch.ones(1) * 1)
    scale = jnp.ones((1,), jnp.float32)      # nn.Parameter(torch.ones(1) * 1)
    out = jax.block_until_ready(inverse_clr(x, beta, scale))
    ref = _reference(x, beta, scale)
    assert out.shape == x.shape and out.dtype == x.dtype
    assert jnp.allclose(out, ref, atol=1e-6, rtol=1e-6), "f32 mismatch"

    # bf16 path: kernel reads/writes bf16, computes in f32 vregs.
    xb = (jax.random.normal(k2, (2, 8, 32, 32), dtype=jnp.float32) * 3.0
          ).astype(jnp.bfloat16)
    beta2 = jnp.asarray([0.75], jnp.float32)
    scale2 = jnp.asarray([0.5], jnp.float32)
    outb = jax.block_until_ready(inverse_clr(xb, beta2, scale2))
    refb = _reference(xb, beta2, scale2)
    assert outb.shape == xb.shape and outb.dtype == jnp.bfloat16
    assert jnp.allclose(outb.astype(jnp.float32), refb.astype(jnp.float32),
                        atol=5e-2, rtol=5e-2), "bf16 mismatch"

    # Odd element count (not a multiple of 128) exercises the pad-free ragged
    # (1, n) path.
    xo = jax.random.normal(k3, (3, 37), dtype=jnp.float32)
    outo = jax.block_until_ready(inverse_clr(xo, beta2, scale2))
    refo = _reference(xo, beta2, scale2)
    assert outo.shape == xo.shape
    assert jnp.allclose(outo, refo, atol=1e-5, rtol=1e-5), "odd-size mismatch"

    print("KERNEL_OK")
</pallas_src>

<mosaic_0001>
module attributes {stable_mosaic.version = 11 : i64} {
  func.func @_inverse_clr_kernel(%arg0: i32, %arg1: memref<1xf32, #tpu.memory_space<smem>>, %arg2: memref<1x2048xf32, #tpu.memory_space<vmem>>, %arg3: memref<1x2048xf32, #tpu.memory_space<vmem>>) attributes {dimension_semantics = [#tpu.dimension_semantics<parallel>], iteration_bounds = array<i64: 1>, scalar_prefetch = 1 : i64, scratch_operands = 0 : i64, tpu.core_type = #tpu.core_type<tc>, window_params = [{transform_indices = @transform_0, window_bounds = array<i64: 1, 2048>}, {transform_indices = @transform_1, window_bounds = array<i64: 1, 2048>}]} {
    %c0 = arith.constant 0 : index
    %0 = memref.load %arg1[%c0] : memref<1xf32, #tpu.memory_space<smem>>
    %cst = arith.constant 2.000000e+00 : f32
    %1 = arith.mulf %cst, %0 : f32
    %c0_0 = arith.constant 0 : index
    %c0_1 = arith.constant 0 : index
    %2 = vector.load %arg2[%c0_0, %c0_1] : memref<1x2048xf32, #tpu.memory_space<vmem>>, vector<1x2048xf32>
    %cst_2 = arith.constant 0.000000e+00 : f32
    %3 = vector.broadcast %cst_2 : f32 to vector<1x2048xf32>
    %4 = arith.cmpf olt, %2, %3 : vector<1x2048xf32>
    %cst_3 = arith.constant 0.000000e+00 : f32
    %5 = arith.subf %cst_3, %1 : f32
    %6 = vector.broadcast %5 : f32 to vector<1x2048xf32>
    %7 = vector.broadcast %1 : f32 to vector<1x2048xf32>
    %8 = arith.select %4, %6, %7 : vector<1x2048xi1>, vector<1x2048xf32>
    %9 = arith.subf %8, %2 : vector<1x2048xf32>
    %10 = math.absf %2 : vector<1x2048xf32>
    %11 = vector.broadcast %0 : f32 to vector<1x2048xf32>
    %12 = arith.cmpf olt, %10, %11 : vector<1x2048xf32>
    %13 = arith.select %12, %2, %9 : vector<1x2048xi1>, vector<1x2048xf32>
    %c0_4 = arith.constant 0 : index
    %c0_5 = arith.constant 0 : index
    %14 = vector.load %arg3[%c0_4, %c0_5] : memref<1x2048xf32, #tpu.memory_space<vmem>>, vector<1x2048xf32>
    tpu.vector_store %arg3[%c0_4, %c0_5], %13 {strides = array<i32>} : memref<1x2048xf32, #tpu.memory_space<vmem>>, vector<1x2048xf32>,
    return
  }
  func.func @transform_0(%arg0: i32, %arg1: memref<1xf32, #tpu.memory_space<smem>>) -> (i32, i32) {
    %c0_i32 = arith.constant 0 : i32
    %c0_i32_0 = arith.constant 0 : i32
    return %arg0, %c0_i32 : i32, i32
  }
  func.func @transform_1(%arg0: i32, %arg1: memref<1xf32, #tpu.memory_space<smem>>) -> (i32, i32) {
    %c0_i32 = arith.constant 0 : i32
    %c0_i32_0 = arith.constant 0 : i32
    return %arg0, %c0_i32 : i32, i32
  }
}

</mosaic_0001>

<llo_original>
// kernel: inverse_clr.1
$region0: #{inverse_clr.1}
  #allocation0 [shape = 'u32[]', space=smem, size = 0x4, offset = 0x4, fixed_abs, tag = 'smem constant byte address 0x4 - core index']
  #allocation1 [shape = 'u32[144,128]{1,0:T(1,128)}', space=vmem, size = 0x12000, scoped, tag = 'internal scratch']
  #allocation2 [shape = 's32[1]{0}', space=sflag, size = 0x4, scoped, tag = 'scoped memory for inverse_clr.1']
  #allocation3 [shape = 'f32[1]{0:T(128)S(6)}', space=smem, size = 0x200, scoped, tag = 'prefetched SMEM operand 0']
  %s0 = inlined_call_operand.<no memory space> [shape: f32[1], index: 0, kind: input, shape index: {}]
  %s1 = inlined_call_operand.vmem [shape: f32[1,2048], index: 1, kind: input, shape index: {}]
  %s2 = inlined_call_operand.vmem [shape: f32[1,2048], index: 2, kind: output, shape index: {}]
  %s3 = sld [smem:[#allocation0]]
  $region14: #{inverse_clr.1} parent=0
    _
  %s5 = ssub.s32 1, %s3
  %s6 = scalar_select 0, %s5, %s3
  %7 = sst [smem:[#allocation3]] %s0
  // Predicated region
  $region2: #{inverse_clr.1} parent=0 // pred_check
    _
  $region3: #{inverse_clr.1} parent=0 // pred_check_branch
    %9 = sbr.rel (0) target = $region5
  $region4: #{inverse_clr.1} parent=0 // pred_region
    _
  $region5: #{inverse_clr.1} parent=0 // pred_fallthru
    _
  %s10 = sld [smem:[#allocation3]]
  %s11 = smul.f32 %s10, 2.0
  %v12 = vld [vmem:[%s1] sm:$0xff]
  %v13 = vld [vmem:[%s1 + $0x8] sm:$0xff]
  %vm14 = vcmp.lt.f32.partialorder %v12, 0.0
  %vm15 = vcmp.lt.f32.partialorder %v13, 0.0
  %s16 = ssub.f32 0.0, %s11
  %v17 = vstv %s16
  %v18 = vstv %s11
  %v19 = vsel %vm14, %v17, %v18
  %v20 = vsel %vm15, %v17, %v18
  %v21 = vsub.f32 %v19, %v12
  %v22 = vsub.f32 %v20, %v13
  %v23 = vand.u32 2147483647, %v12
  %v24 = vand.u32 2147483647, %v13
  %v25 = vstv %s10
  %vm26 = vcmp.lt.f32.partialorder %v23, %v25
  %vm27 = vcmp.lt.f32.partialorder %v24, %v25
  %v28 = vsel %vm26, %v12, %v21
  %v29 = vsel %vm27, %v13, %v22
  %30 = vst [vmem:[%s2] sm:$0xff] %v28
  %31 = vst [vmem:[%s2 + $0x8] sm:$0xff] %v29
  // Predicated region
  $region6: #{inverse_clr.1} parent=0 // pred_check
    _
  $region7: #{inverse_clr.1} parent=0 // pred_check_branch
    %33 = sbr.rel (0) target = $region9
  $region8: #{inverse_clr.1} parent=0 // pred_region
    _
  $region9: #{inverse_clr.1} parent=0 // pred_fallthru
    _
  // Predicated region
  $region10: #{inverse_clr.1} parent=0 // pred_check
    _
  $region11: #{inverse_clr.1} parent=0 // pred_check_branch
    %35 = sbr.rel (0) target = $region13
  $region12: #{inverse_clr.1} parent=0 // pred_region
    _
  $region13: #{inverse_clr.1} parent=0 // pred_fallthru
    _

</llo_original>
